<compile_context>
chip_gen: v6e
topology: v6e:2x2x1
jax: 0.10.0
libtpu: 0.0.40
codegen_flags: <defaults>
</compile_context>

<pallas_src>
import functools
import math

import jax
import jax.numpy as jnp
from jax.experimental import pallas as pl
from jax.experimental.pallas import tpu as pltpu


# ----------------------------------------------------------------------------
# Generic fused linear kernel (used only for the conv-subsampling matmuls)
# ----------------------------------------------------------------------------

def _linear_kernel(x_ref, w_ref, b_ref, o_ref, *, activation):
    x = x_ref[...].astype(jnp.float32)
    w = w_ref[...].astype(jnp.float32)
    y = jnp.dot(x, w, preferred_element_type=jnp.float32)
    y = y + b_ref[...].astype(jnp.float32)
    if activation == "relu":
        y = jnp.maximum(y, 0.0)
    o_ref[...] = y.astype(o_ref.dtype)


def pallas_linear(x, w, b, activation=None):
    """x: (M, K), w: (K, N), b: (N,) -> (M, N)."""
    M, Kd = x.shape
    N = w.shape[1]
    # Row-tile into 2 parallel grid steps when cleanly possible (keeps both v7x cores busy).
    mt = M // 2 if (M % 2 == 0 and (M // 2) % 8 == 0) else M
    grid_m = M // mt
    kern = functools.partial(_linear_kernel, activation=activation)
    return pl.pallas_call(
        kern,
        out_shape=jax.ShapeDtypeStruct((M, N), x.dtype),
        grid=(grid_m,),
        in_specs=[
            pl.BlockSpec((mt, Kd), lambda i: (i, 0)),
            pl.BlockSpec((Kd, N), lambda i: (0, 0)),
            pl.BlockSpec((1, N), lambda i: (0, 0)),
        ],
        out_specs=pl.BlockSpec((mt, N), lambda i: (i, 0)),
        compiler_params=pltpu.CompilerParams(
            dimension_semantics=("parallel",)),
    )(x, w, b.reshape(1, N))


# ----------------------------------------------------------------------------
# Fused Conformer block kernel (one pallas_call per layer, grid over batch)
# ----------------------------------------------------------------------------

def _conformer_block_kernel(
        x_ref, m_ref,
        # FFN1
        ff1_ln_g, ff1_ln_b, ff1_w1, ff1_b1, ff1_w2, ff1_b2,
        # MHSA
        attn_ln_g, attn_ln_b, wq, bq, wk, bk, wv, bv, wo, bo,
        # Conv module
        conv_ln_g, conv_ln_b, pw1_wa, pw1_ba, pw1_wb, pw1_bb,
        dw_w, dw_b, bn_g, bn_b, pw2_w, pw2_b,
        # FFN2 + final LN
        ff2_ln_g, ff2_ln_b, ff2_w1, ff2_b1, ff2_w2, ff2_b2,
        final_ln_g, final_ln_b,
        o_ref,
        *, T, D, H, K, eps, scale):
    Dh = D // H

    def ln(x, g_ref, b_ref):
        mu = jnp.mean(x, axis=-1, keepdims=True)
        var = jnp.mean((x - mu) ** 2, axis=-1, keepdims=True)
        return (x - mu) * jax.lax.rsqrt(var + eps) * g_ref[...] + b_ref[...]

    def lin(x, w_ref, b_ref):
        return jnp.dot(x, w_ref[...],
                       preferred_element_type=jnp.float32) + b_ref[...]

    def swish(x):
        return x * jax.nn.sigmoid(x)

    x = x_ref[...].reshape(T, D).astype(jnp.float32)
    key_mask = m_ref[...].reshape(1, T).astype(jnp.float32)   # 1 keep / 0 pad

    # ---- 1) first half-step feed-forward ----
    h = ln(x, ff1_ln_g, ff1_ln_b)
    h = swish(lin(h, ff1_w1, ff1_b1))
    h = lin(h, ff1_w2, ff1_b2)
    x = x + 0.5 * h

    # ---- 2) multi-head self-attention (all heads inside one kernel invocation) ----
    # TODO(synk): reference Conformer uses relative positional MHSA; plain MHSA used here.
    h = ln(x, attn_ln_g, attn_ln_b)
    q = lin(h, wq, bq)                     # (T, D)
    k = lin(h, wk, bk)
    v = lin(h, wv, bv)
    wo_v = wo[...].astype(jnp.float32)     # (D, D)
    attn_out = jnp.zeros((T, D), jnp.float32)
    for hh in range(H):                    # static unroll, all in vregs
        lo = hh * Dh
        qh = q[:, lo:lo + Dh]
        kh = k[:, lo:lo + Dh]
        vh = v[:, lo:lo + Dh]
        s = jnp.dot(qh, kh.T, preferred_element_type=jnp.float32) * scale
        s = jnp.where(key_mask > 0.0, s, -1e9)          # mask keys (broadcast over queries)
        s = s - jnp.max(s, axis=-1, keepdims=True)
        p = jnp.exp(s)
        p = p * pl.reciprocal(jnp.sum(p, axis=-1, keepdims=True), approx=True)
        ctx_h = jnp.dot(p, vh, preferred_element_type=jnp.float32)   # (T, Dh)
        # concat-over-heads + out-proj == sum over heads of ctx_h @ wo[head rows]
        attn_out = attn_out + jnp.dot(ctx_h, wo_v[lo:lo + Dh, :],
                                      preferred_element_type=jnp.float32)
    x = x + attn_out + bo[...]

    # ---- 3) convolution module ----
    # TODO(synk): padded timesteps are not zeroed before the depthwise conv (mask is only
    # used inside attention, matching the assumed reference encoder behaviour).
    h = ln(x, conv_ln_g, conv_ln_b)
    ga = lin(h, pw1_wa, pw1_ba)
    gb = lin(h, pw1_wb, pw1_bb)
    h = ga * jax.nn.sigmoid(gb)            # GLU via two split matmuls (no lane slicing)

    # depthwise 'same' 1-D conv over time: XLU rolls + boundary masks (zero padding)
    pad = K // 2
    t_idx = jax.lax.broadcasted_iota(jnp.int32, (T, D), 0)
    dwk = dw_w[...].astype(jnp.float32)    # (K, D)
    acc = jnp.zeros((T, D), jnp.float32)
    for kk in range(K):                    # static taps
        off = kk - pad
        shift = (-off) % T
        shifted = pltpu.roll(h, shift, 0) if shift else h    # out[t] <- h[t + off] (wrapped)
        valid = jnp.logical_and(t_idx + off >= 0, t_idx + off < T)
        acc = acc + jnp.where(valid, shifted, 0.0) * dwk[kk:kk + 1, :]
    h = acc + dw_b[...]

    # BatchNorm1d (eval mode, fresh running stats: mean=0, var=1) == affine; fused with swish.
    h = swish(h * bn_g[...] + bn_b[...])
    h = lin(h, pw2_w, pw2_b)               # second pointwise conv
    x = x + h

    # ---- 4) second half-step feed-forward + final layer norm ----
    h = ln(x, ff2_ln_g, ff2_ln_b)
    h = swish(lin(h, ff2_w1, ff2_b1))
    h = lin(h, ff2_w2, ff2_b2)
    x = x + 0.5 * h
    x = ln(x, final_ln_g, final_ln_b)

    o_ref[...] = x.reshape(1, T, D).astype(o_ref.dtype)


def conformer_block(x, mask_f, p, cfg):
    """x: (B, T, D), mask_f: (B, T) float32. One fused pallas_call for the whole block."""
    B, T, D = x.shape
    H = cfg["num_heads"]
    K = cfg["dw_kernel"]

    def v2(a):          # 1-D vectors as (1, N) 2-D blocks
        return a.reshape(1, -1)

    params = [
        # FFN1
        v2(p["ff1_ln_g"]), v2(p["ff1_ln_b"]), p["ff1_w1"], v2(p["ff1_b1"]),
        p["ff1_w2"], v2(p["ff1_b2"]),
        # MHSA
        v2(p["attn_ln_g"]), v2(p["attn_ln_b"]),
        p["wq"], v2(p["bq"]), p["wk"], v2(p["bk"]), p["wv"], v2(p["bv"]),
        p["wo"], v2(p["bo"]),
        # Conv module
        v2(p["conv_ln_g"]), v2(p["conv_ln_b"]),
        p["pw1_wa"], v2(p["pw1_ba"]), p["pw1_wb"], v2(p["pw1_bb"]),
        p["dw_w"], v2(p["dw_b"]), v2(p["bn_g"]), v2(p["bn_b"]),
        p["pw2_w"], v2(p["pw2_b"]),
        # FFN2 + final LN
        v2(p["ff2_ln_g"]), v2(p["ff2_ln_b"]), p["ff2_w1"], v2(p["ff2_b1"]),
        p["ff2_w2"], v2(p["ff2_b2"]),
        v2(p["final_ln_g"]), v2(p["final_ln_b"]),
    ]

    param_specs = [pl.BlockSpec(a.shape, lambda b: (0, 0)) for a in params]

    kern = functools.partial(
        _conformer_block_kernel,
        T=T, D=D, H=H, K=K, eps=1e-5, scale=1.0 / math.sqrt(D // H))

    return pl.pallas_call(
        kern,
        out_shape=jax.ShapeDtypeStruct((B, T, D), x.dtype),
        grid=(B,),
        in_specs=[
            pl.BlockSpec((1, T, D), lambda b: (b, 0, 0)),
            pl.BlockSpec((1, T), lambda b: (b, 0)),
        ] + param_specs,
        out_specs=pl.BlockSpec((1, T, D), lambda b: (b, 0, 0)),
        compiler_params=pltpu.CompilerParams(
            dimension_semantics=("parallel",)),
    )(x, mask_f, *params)


# ----------------------------------------------------------------------------
# Conv subsampling (im2col glue in JAX, matmuls in Pallas)
# ----------------------------------------------------------------------------

MODEL_CONFIG = dict(
    feat_dim=16,        # input feature dim (freq bins)
    conv_channels=32,   # subsampling conv channels
    d_model=32,
    num_heads=4,
    ff_dim=128,
    dw_kernel=7,
    num_layers=2,
)


def conv2d_stride2_relu(x, w, b):
    """3x3 stride-2 pad-1 conv (NHWC) via im2col (glue) + Pallas matmul (+ReLU)."""
    B, H, W, Cin = x.shape
    xp = jnp.pad(x, ((0, 0), (1, 1), (1, 1), (0, 0)))
    Ho = (H - 1) // 2 + 1
    Wo = (W - 1) // 2 + 1
    patches = []
    for kh in range(3):
        for kw in range(3):
            patches.append(xp[:, kh:kh + 2 * Ho - 1:2, kw:kw + 2 * Wo - 1:2, :])
    col = jnp.concatenate(patches, axis=-1)            # (B, Ho, Wo, 9*Cin)
    Cout = w.shape[1]
    out = pallas_linear(col.reshape(B * Ho * Wo, 9 * Cin), w, b, activation="relu")
    return out.reshape(B, Ho, Wo, Cout)


def conv_subsampling(x, lengths, p, cfg):
    """x: (B, T, F) -> (B, T//4 (conv arithmetic), d_model); lengths updated like torch Conv2d."""
    B, T, F = x.shape
    h = x[:, :, :, None]                               # (B, T, F, 1) NHWC
    h = conv2d_stride2_relu(h, p["conv1_w"], p["conv1_b"])
    h = conv2d_stride2_relu(h, p["conv2_w"], p["conv2_b"])
    B, T2, F2, C = h.shape
    # match torch: (B, C, T2, F2).transpose(1,2).reshape(B, T2, C*F2)
    h = jnp.transpose(h, (0, 1, 3, 2)).reshape(B, T2, C * F2)
    h = pallas_linear(h.reshape(B * T2, C * F2), p["proj_w"], p["proj_b"])
    h = h.reshape(B, T2, cfg["d_model"])

    def conv_len(L):
        return (L + 2 * 1 - 3) // 2 + 1
    lengths = conv_len(conv_len(lengths))
    return h, lengths


def conformer_model_forward(input_values, input_lengths, params, cfg):
    """Mirrors ConformerModel.forward: subsampling -> mask from lengths -> encoder."""
    hidden_states, input_lengths = conv_subsampling(
        input_values, input_lengths, params["subsampling"], cfg)
    B, T, _ = hidden_states.shape
    range_tensor = jnp.broadcast_to(jnp.arange(T)[None, :], (B, T))
    attention_mask = (range_tensor < input_lengths[:, None])
    mask_f = attention_mask.astype(jnp.float32)
    for li in range(cfg["num_layers"]):
        hidden_states = conformer_block(hidden_states, mask_f,
                                        params["layers"][li], cfg)
    return hidden_states, input_lengths


# ----------------------------------------------------------------------------
# Deterministic parameter initialisation
# ----------------------------------------------------------------------------

def init_params(key, cfg):
    D = cfg["d_model"]
    C = cfg["conv_channels"]
    F = cfg["feat_dim"]
    FF = cfg["ff_dim"]
    K = cfg["dw_kernel"]

    keys = iter(jax.random.split(key, 256))

    def nrm(shape, scale=0.02):
        return scale * jax.random.normal(next(keys), shape, jnp.float32)

    def zeros(shape):
        return jnp.zeros(shape, jnp.float32)

    def ones(shape):
        return jnp.ones(shape, jnp.float32)

    F2 = ((F - 1) // 2 + 1 - 1) // 2 + 1   # freq dim after two stride-2 convs
    sub = dict(
        conv1_w=nrm((9 * 1, C)), conv1_b=zeros((C,)),
        conv2_w=nrm((9 * C, C)), conv2_b=zeros((C,)),
        proj_w=nrm((C * F2, D)), proj_b=zeros((D,)),
    )

    layers = []
    for _ in range(cfg["num_layers"]):
        layers.append(dict(
            ff1_ln_g=ones((D,)), ff1_ln_b=zeros((D,)),
            ff1_w1=nrm((D, FF)), ff1_b1=zeros((FF,)),
            ff1_w2=nrm((FF, D)), ff1_b2=zeros((D,)),
            attn_ln_g=ones((D,)), attn_ln_b=zeros((D,)),
            # QKV stored as three split (D, D) matrices (lane-friendly, no in-kernel split)
            wq=nrm((D, D)), bq=zeros((D,)),
            wk=nrm((D, D)), bk=zeros((D,)),
            wv=nrm((D, D)), bv=zeros((D,)),
            wo=nrm((D, D)), bo=zeros((D,)),
            conv_ln_g=ones((D,)), conv_ln_b=zeros((D,)),
            # pointwise-1 (GLU) stored as two split halves
            pw1_wa=nrm((D, D)), pw1_ba=zeros((D,)),
            pw1_wb=nrm((D, D)), pw1_bb=zeros((D,)),
            dw_w=nrm((K, D)), dw_b=zeros((D,)),
            bn_g=ones((D,)), bn_b=zeros((D,)),
            pw2_w=nrm((D, D)), pw2_b=zeros((D,)),
            ff2_ln_g=ones((D,)), ff2_ln_b=zeros((D,)),
            ff2_w1=nrm((D, FF)), ff2_b1=zeros((FF,)),
            ff2_w2=nrm((FF, D)), ff2_b2=zeros((D,)),
            final_ln_g=ones((D,)), final_ln_b=zeros((D,)),
        ))
    return dict(subsampling=sub, layers=layers)


# ----------------------------------------------------------------------------
# Main
# ----------------------------------------------------------------------------

if __name__ == "__main__":
    cfg = MODEL_CONFIG
    key = jax.random.PRNGKey(0)
    k_param, k_input = jax.random.split(key)

    params = init_params(k_param, cfg)

    B, T, F = 2, 32, cfg["feat_dim"]
    input_values = jax.random.normal(k_input, (B, T, F), jnp.float32)
    input_lengths = jnp.array([32, 24], dtype=jnp.int32)

    hidden_states, out_lengths = conformer_model_forward(
        input_values, input_lengths, params, cfg)

    hidden_states = jax.block_until_ready(hidden_states)
    out_lengths = jax.block_until_ready(out_lengths)

    expected_T = ((T + 2 - 3) // 2 + 1 + 2 - 3) // 2 + 1
    assert hidden_states.shape == (B, expected_T, cfg["d_model"])
    assert out_lengths.shape == (B,)
    assert bool(jnp.all(jnp.isfinite(hidden_states)))

    print("KERNEL_OK")
</pallas_src>

<mosaic_0001>
module attributes {stable_mosaic.version = 11 : i64} {
  func.func @_linear_kernel(%arg0: i32, %arg1: memref<128x9xf32, #tpu.memory_space<vmem>>, %arg2: memref<9x32xf32, #tpu.memory_space<vmem>>, %arg3: memref<1x32xf32, #tpu.memory_space<vmem>>, %arg4: memref<128x32xf32, #tpu.memory_space<vmem>>) attributes {dimension_semantics = [#tpu.dimension_semantics<parallel>], iteration_bounds = array<i64: 2>, scalar_prefetch = 0 : i64, scratch_operands = 0 : i64, tpu.core_type = #tpu.core_type<tc>, window_params = [{transform_indices = @transform_0, window_bounds = array<i64: 128, 9>}, {pipeline_mode = #tpu.pipeline_mode<synchronous>, transform_indices = @transform_1, window_bounds = array<i64: 9, 32>}, {pipeline_mode = #tpu.pipeline_mode<synchronous>, transform_indices = @transform_2, window_bounds = array<i64: 1, 32>}, {transform_indices = @transform_3, window_bounds = array<i64: 128, 32>}]} {
    %c0 = arith.constant 0 : index
    %c0_0 = arith.constant 0 : index
    %0 = vector.load %arg1[%c0, %c0_0] : memref<128x9xf32, #tpu.memory_space<vmem>>, vector<128x9xf32>
    %c0_1 = arith.constant 0 : index
    %c0_2 = arith.constant 0 : index
    %1 = vector.load %arg2[%c0_1, %c0_2] : memref<9x32xf32, #tpu.memory_space<vmem>>, vector<9x32xf32>
    %cst = arith.constant dense<0.000000e+00> : vector<128x32xf32>
    %2 = tpu.matmul %0, %1, %cst {dimension_numbers = #tpu.dot_dimension_numbers<[1], [0], [0], [1], [0, 0, 1, 1], [], []>} : vector<128x9xf32>, vector<9x32xf32>, vector<128x32xf32> -> vector<128x32xf32>
    %c0_3 = arith.constant 0 : index
    %c0_4 = arith.constant 0 : index
    %3 = vector.load %arg3[%c0_3, %c0_4] : memref<1x32xf32, #tpu.memory_space<vmem>>, vector<1x32xf32>
    %4 = vector.broadcast %3 : vector<1x32xf32> to vector<128x32xf32>
    %5 = arith.addf %2, %4 : vector<128x32xf32>
    %cst_5 = arith.constant 0.000000e+00 : f32
    %6 = vector.broadcast %cst_5 : f32 to vector<128x32xf32>
    %7 = arith.maximumf %5, %6 : vector<128x32xf32>
    %c0_6 = arith.constant 0 : index
    %c0_7 = arith.constant 0 : index
    %8 = vector.load %arg4[%c0_6, %c0_7] : memref<128x32xf32, #tpu.memory_space<vmem>>, vector<128x32xf32>
    tpu.vector_store %arg4[%c0_6, %c0_7], %7 {strides = array<i32>} : memref<128x32xf32, #tpu.memory_space<vmem>>, vector<128x32xf32>,
    return
  }
  func.func @transform_0(%arg0: i32) -> (i32, i32) {
    %c0_i32 = arith.constant 0 : i32
    %c0_i32_0 = arith.constant 0 : i32
    return %arg0, %c0_i32 : i32, i32
  }
  func.func @transform_1(%arg0: i32) -> (i32, i32) {
    %c0_i32 = arith.constant 0 : i32
    %c0_i32_0 = arith.constant 0 : i32
    %c0_i32_1 = arith.constant 0 : i32
    return %c0_i32, %c0_i32_0 : i32, i32
  }
  func.func @transform_2(%arg0: i32) -> (i32, i32) {
    %c0_i32 = arith.constant 0 : i32
    %c0_i32_0 = arith.constant 0 : i32
    %c0_i32_1 = arith.constant 0 : i32
    return %c0_i32, %c0_i32_0 : i32, i32
  }
  func.func @transform_3(%arg0: i32) -> (i32, i32) {
    %c0_i32 = arith.constant 0 : i32
    %c0_i32_0 = arith.constant 0 : i32
    return %arg0, %c0_i32 : i32, i32
  }
}

</mosaic_0001>

<llo_original>
// kernel: tpu_custom_call.1
$region0: #{tpu_custom_call.1}
  #allocation0 [shape = 'u32[]', space=smem, size = 0x4, offset = 0x4, fixed_abs, tag = 'smem constant byte address 0x4 - core index']
  #allocation1 [shape = 'u32[144,128]{1,0:T(1,128)}', space=vmem, size = 0x12000, scoped, tag = 'internal scratch']
  %s0 = inlined_call_operand.vmem [shape: f32[256,9], index: 0, kind: input, shape index: {}]
  %s1 = inlined_call_operand.vmem [shape: f32[9,32], index: 1, kind: input, shape index: {}]
  %s2 = inlined_call_operand.vmem [shape: f32[1,32], index: 2, kind: input, shape index: {}]
  %s3 = inlined_call_operand.vmem [shape: f32[256,32], index: 3, kind: output, shape index: {}]
  %s4 = sld [smem:[#allocation0]]
  $region45: #{tpu_custom_call.1} parent=0
    _
  %s6 = ssub.s32 1, %s4
  %s7 = scalar_select 0, %s6, %s4
  loop: start=0, step=1, limit=4
  $region2: #{tpu_custom_call.1} parent=0 // loop_pre_header
    _
  $region3: #{tpu_custom_call.1} parent=0 // loop_header
    %s9 = sphi 0, %s13
    %p10 = scmp.ge.s32.totalorder %s9, 4
    %s19 = sphi 0, %s21
    %s22 = sphi 0, %s19
    %s23 = sphi 0, %s22
    %s39 = sphi 0, %s23
    %s43 = sphi 0, %s43
    %s45 = sphi 0, %s43
    %s46 = sphi 0, %s45
    %s60 = sphi 0, %s46
    %s64 = sphi 0, %s64
    %s66 = sphi 0, %s64
    %s67 = sphi 0, %s66
    %s81 = sphi 0, %s67
    %s87 = sphi 0, %s89
    %s90 = sphi 0, %s87
    %s91 = sphi 0, %s90
    %s107 = sphi 0, %s91
  $region4: #{tpu_custom_call.1} parent=0 // loop_header_branch
    %12 = sbr.rel (%p10) target = $region8
  $region5: #{tpu_custom_call.1} parent=0 // loop_body
    %s14 = ssub.s32 %s9, 1
    %s15 = ssub.s32 %s9, 2
    %s16 = sadd.s32 %s9, 1
    %s17 = ssub.s32 %s9, %s16
    %p18 = scmp.eq.s32.totalorder %s17, 0
    %s20 = sadd.s32 %s19, 1
    %s21 = scalar_select %p18, %s19, %s20
    %p24 = pneg %p18
    %p25 = scmp.eq.s32.totalorder %s9, 1
    %p26 = por %p24, %p25
    %p27 = scmp.ne.s32.totalorder %s19, %s22
    %p28 = scmp.eq.s32.totalorder %s9, 0
    %p29 = por %p27, %p28
    %p30 = scmp.ne.s32.totalorder %s19, %s22
    %p31 = scmp.eq.s32.totalorder %s14, 1
    %p32 = por %p30, %p31
    %p33 = scmp.ne.s32.totalorder %s22, %s23
    %p34 = scmp.eq.s32.totalorder %s14, 0
    %p35 = por %p33, %p34
    %p36 = scmp.ne.s32.totalorder %s22, %s23
    %p37 = scmp.eq.s32.totalorder %s15, 1
    %p38 = por %p36, %p37
    %p40 = scmp.ne.s32.totalorder %s23, %s39
    %p41 = scmp.eq.s32.totalorder %s15, 0
    %p42 = por %p40, %p41
    %s44 = sadd.s32 %s43, 1
    %p47 = scmp.eq.s32.totalorder %s9, 1
    %p48 = scmp.ne.s32.totalorder %s43, %s45
    %p49 = scmp.eq.s32.totalorder %s9, 0
    %p50 = por %p48, %p49
    %p51 = scmp.ne.s32.totalorder %s43, %s45
    %p52 = scmp.eq.s32.totalorder %s14, 1
    %p53 = por %p51, %p52
    %p54 = scmp.ne.s32.totalorder %s45, %s46
    %p55 = scmp.eq.s32.totalorder %s14, 0
    %p56 = por %p54, %p55
    %p57 = scmp.ne.s32.totalorder %s45, %s46
    %p58 = scmp.eq.s32.totalorder %s15, 1
    %p59 = por %p57, %p58
    %p61 = scmp.ne.s32.totalorder %s46, %s60
    %p62 = scmp.eq.s32.totalorder %s15, 0
    %p63 = por %p61, %p62
    %s65 = sadd.s32 %s64, 1
    %p68 = scmp.eq.s32.totalorder %s9, 1
    %p69 = scmp.ne.s32.totalorder %s64, %s66
    %p70 = scmp.eq.s32.totalorder %s9, 0
    %p71 = por %p69, %p70
    %p72 = scmp.ne.s32.totalorder %s64, %s66
    %p73 = scmp.eq.s32.totalorder %s14, 1
    %p74 = por %p72, %p73
    %p75 = scmp.ne.s32.totalorder %s66, %s67
    %p76 = scmp.eq.s32.totalorder %s14, 0
    %p77 = por %p75, %p76
    %p78 = scmp.ne.s32.totalorder %s66, %s67
    %p79 = scmp.eq.s32.totalorder %s15, 1
    %p80 = por %p78, %p79
    %p82 = scmp.ne.s32.totalorder %s67, %s81
    %p83 = scmp.eq.s32.totalorder %s15, 0
    %p84 = por %p82, %p83
    %s85 = ssub.s32 %s9, %s16
    %p86 = scmp.eq.s32.totalorder %s85, 0
    %s88 = sadd.s32 %s87, 1
    %s89 = scalar_select %p86, %s87, %s88
    %p92 = pneg %p86
    %p93 = scmp.eq.s32.totalorder %s9, 1
    %p94 = por %p92, %p93
    %p95 = scmp.ne.s32.totalorder %s87, %s90
    %p96 = scmp.eq.s32.totalorder %s9, 0
    %p97 = por %p95, %p96
    %p98 = scmp.ne.s32.totalorder %s87, %s90
    %p99 = scmp.eq.s32.totalorder %s14, 1
    %p100 = por %p98, %p99
    %p101 = scmp.ne.s32.totalorder %s90, %s91
    %p102 = scmp.eq.s32.totalorder %s14, 0
    %p103 = por %p101, %p102
    %p104 = scmp.ne.s32.totalorder %s90, %s91
    %p105 = scmp.eq.s32.totalorder %s15, 1
    %p106 = por %p104, %p105
    %p108 = scmp.ne.s32.totalorder %s91, %s107
    %p109 = scmp.eq.s32.totalorder %s15, 0
    %p110 = por %p108, %p109
    %p111 = scmp.le.s32.totalorder 1, %s9
    %p112 = scmp.lt.s32.totalorder %s9, 3
    %p113 = pnand %p111, %p112
    %p114 = pneg %p113
    // Predicated region
    $region9: #{tpu_custom_call.1} parent=5 // pred_check
      _
    $region10: #{tpu_custom_call.1} parent=5 // pred_check_branch
      %116 = sbr.rel (%p113) target = $region12
    $region11: #{tpu_custom_call.1} parent=5 // pred_region
      %s117 = ssub.s32 %s9, 1
      // Predicated region
      $region13: #{tpu_custom_call.1} parent=11 // pred_check
        %p118 = pneg %p56
      $region14: #{tpu_custom_call.1} parent=11 // pred_check_branch
        %120 = sbr.rel (%p118) target = $region16
      $region15: #{tpu_custom_call.1} parent=11 // pred_region
        _
      $region16: #{tpu_custom_call.1} parent=11 // pred_fallthru
        _
      // Predicated region
      $region17: #{tpu_custom_call.1} parent=11 // pred_check
        %p121 = pneg %p77
      $region18: #{tpu_custom_call.1} parent=11 // pred_check_branch
        %123 = sbr.rel (%p121) target = $region20
      $region19: #{tpu_custom_call.1} parent=11 // pred_region
        _
      $region20: #{tpu_custom_call.1} parent=11 // pred_fallthru
        _
    $region12: #{tpu_custom_call.1} parent=5 // pred_fallthru
      _
    %p124 = scmp.lt.s32.totalorder %s9, 2
    // Predicated region
    $region21: #{tpu_custom_call.1} parent=5 // pred_check
      %p125 = pneg %p124
    $region22: #{tpu_custom_call.1} parent=5 // pred_check_branch
      %127 = sbr.rel (%p125) target = $region24
    $region23: #{tpu_custom_call.1} parent=5 // pred_region
      // Predicated region
      $region25: #{tpu_custom_call.1} parent=23 // pred_check
        %p128 = pneg %p29
      $region26: #{tpu_custom_call.1} parent=23 // pred_check_branch
        %130 = sbr.rel (%p128) target = $region28
      $region27: #{tpu_custom_call.1} parent=23 // pred_region
        %s131 = smul.u32 16, %s9
        %p132 = scmp.lt.s32.totalorder %s131, 31
        %s133 = scalar_select %p132, %s131, 31
        %s134 = smul.addr %s133, 8
        %s135 = scalar_lea.vmem %s0, %s134
        %s136 = smul.u32 16, %s9
      $region28: #{tpu_custom_call.1} parent=23 // pred_fallthru
        _
    $region24: #{tpu_custom_call.1} parent=5 // pred_fallthru
      _
    %p137 = scmp.le.s32.totalorder 1, %s9
    %p138 = scmp.lt.s32.totalorder %s9, 3
    %p139 = pnand %p137, %p138
    %p140 = pneg %p139
    // Predicated region
    $region29: #{tpu_custom_call.1} parent=5 // pred_check
      _
    $region30: #{tpu_custom_call.1} parent=5 // pred_check_branch
      %142 = sbr.rel (%p139) target = $region32
    $region31: #{tpu_custom_call.1} parent=5 // pred_region
      %s143 = ssub.s32 %s9, 1
      %s144 = smul.u32 16, %s14
      %p145 = scmp.lt.s32.totalorder %s144, 31
      %s146 = scalar_select %p145, %s144, 31
      %s147 = smul.addr %s146, 8
      %s148 = scalar_lea.vmem %s0, %s147
      %p149 = pneg %p35
      %p150 = pneg %p32
      %p151 = pneg %p56
      %p152 = pneg %p53
      %p153 = pneg %p77
      %p154 = pneg %p74
      %p155 = pneg %p103
      %p156 = pneg %p100
      %s157 = smul.u32 16, %s14
      %p158 = scmp.lt.s32.totalorder %s157, 31
      %s159 = scalar_select %p158, %s157, 31
      %s160 = smul.addr %s159, 8
      %s161 = scalar_lea.vmem %s3, %s160
      %s162 = smul.u32 16, %s14
      %p163 = scmp.lt.s32.totalorder %s162, 31
      %s164 = scalar_select %p163, %s162, 31
      %s165 = smul.addr %s164, 8
      %s166 = scalar_lea.vmem %s0, %s165
      %s167 = smul.u32 16, %s14
      %s168 = smul.u32 16, %s14
      %p169 = scmp.lt.s32.totalorder %s168, 31
      %s170 = scalar_select %p169, %s168, 31
      %s171 = smul.addr %s170, 8
      %s172 = scalar_lea.vmem %s3, %s171
      %s173 = smul.u32 16, %s14
      %v174 = vld [vmem:[%s166] sm:$0xff]
      %v175 = vld [vmem:[%s166 + $0x8] sm:$0xff]
      %v176 = vld [vmem:[%s166 + $0x10] sm:$0xff]
      %v177 = vld [vmem:[%s166 + $0x18] sm:$0xff]
      %v178 = vld [vmem:[%s166 + $0x20] sm:$0xff]
      %v179 = vld [vmem:[%s166 + $0x28] sm:$0xff]
      %v180 = vld [vmem:[%s166 + $0x30] sm:$0xff]
      %v181 = vld [vmem:[%s166 + $0x38] sm:$0xff]
      %v182 = vld [vmem:[%s166 + $0x40] sm:$0xff]
      %v183 = vld [vmem:[%s166 + $0x48] sm:$0xff]
      %v184 = vld [vmem:[%s166 + $0x50] sm:$0xff]
      %v185 = vld [vmem:[%s166 + $0x58] sm:$0xff]
      %v186 = vld [vmem:[%s166 + $0x60] sm:$0xff]
      %v187 = vld [vmem:[%s166 + $0x68] sm:$0xff]
      %v188 = vld [vmem:[%s166 + $0x70] sm:$0xff]
      %v189 = vld [vmem:[%s166 + $0x78] sm:$0xff]
      %v190 = vld [vmem:[%s1] sm:$0xff]
      %v191 = vld [vmem:[%s1 + $0x8] sm:$0x1]
      %v192 = vld [vmem:[%s2] sm:$0x1]
      %v194 = vlaneseq
      %v195 = vshrl.u32 %v194, 7
      %v196 = vsub.s32 0, %v195
      %v197 = vrot.slane %v192, %v196
      %vm199 = vcmask 72704
      %v201 = vsel %vm199, %v174, 0
      %v204 = vsel %vm199, %v175, 0
      %v207 = vsel %vm199, %v176, 0
      %v210 = vsel %vm199, %v177, 0
      %v213 = vsel %vm199, %v178, 0
      %v216 = vsel %vm199, %v179, 0
      %v219 = vsel %vm199, %v180, 0
      %v222 = vsel %vm199, %v181, 0
      %v225 = vsel %vm199, %v182, 0
      %v228 = vsel %vm199, %v183, 0
      %v231 = vsel %vm199, %v184, 0
      %v234 = vsel %vm199, %v185, 0
      %v237 = vsel %vm199, %v186, 0
      %v240 = vsel %vm199, %v187, 0
      %v243 = vsel %vm199, %v188, 0
      %v246 = vsel %vm199, %v189, 0
      %vm248 = vcmask 1040384
      %v250 = vsel %vm248, %v191, 0
      %252 = vmatprep.subr.mxu0 0.0
      %253 = vmatpush1.msra.mxu0 0.0
      %254 = vmatprep.subr.mxu0 0.0
      %255 = vmatpush1.msra.mxu0 0.0
      %256 = vmatprep.subr.mxu0 0.0
      %257 = vmatpush1.msra.mxu0 0.0
      %258 = vmatprep.subr.mxu0 0.0
      %259 = vmatpush1.msra.mxu0 0.0
      %260 = vmatprep.subr.mxu0 0.0
      %261 = vmatpush1.msra.mxu0 0.0
      %262 = vmatprep.subr.mxu0 0.0
      %263 = vmatpush1.msra.mxu0 0.0
      %264 = vmatprep.subr.mxu0 0.0
      %265 = vmatpush1.msra.mxu0 0.0
      %266 = vmatprep.subr.mxu0 0.0
      %267 = vmatpush1.msra.mxu0 0.0
      %268 = vmatprep.subr.mxu0 0.0
      %269 = vmatpush1.msra.mxu0 0.0
      %270 = vmatprep.subr.mxu0 0.0
      %271 = vmatpush1.msra.mxu0 0.0
      %272 = vmatprep.subr.mxu0 0.0
      %273 = vmatpush1.msra.mxu0 0.0
      %274 = vmatprep.subr.mxu0 0.0
      %275 = vmatpush1.msra.mxu0 0.0
      %276 = vmatprep.subr.mxu0 0.0
      %277 = vmatpush1.msra.mxu0 0.0
      %278 = vmatprep.subr.mxu0 0.0
      %279 = vmatpush1.msra.mxu0 0.0
      %280 = vmatprep.subr.mxu0 0.0
      %281 = vmatpush1.msra.mxu0 %v250
      %282 = vmatprep.subr.mxu0 0.0
      %283 = vmatpush1.msra.mxu0 %v190
      %284 = vmatprep.subr.mxu0 0.0
      %285 = vmatpush2.msra.mxu0 0.0
      %286 = vmatprep.subr.mxu0 0.0
      %287 = vmatpush2.msra.mxu0 0.0
      %288 = vmatprep.subr.mxu0 0.0
      %289 = vmatpush2.msra.mxu0 0.0
      %290 = vmatprep.subr.mxu0 0.0
      %291 = vmatpush2.msra.mxu0 0.0
      %292 = vmatprep.subr.mxu0 0.0
      %293 = vmatpush2.msra.mxu0 0.0
      %294 = vmatprep.subr.mxu0 0.0
      %295 = vmatpush2.msra.mxu0 0.0
      %296 = vmatprep.subr.mxu0 0.0
      %297 = vmatpush2.msra.mxu0 0.0
      %298 = vmatprep.subr.mxu0 0.0
      %299 = vmatpush2.msra.mxu0 0.0
      %300 = vmatprep.subr.mxu0 0.0
      %301 = vmatpush2.msra.mxu0 0.0
      %302 = vmatprep.subr.mxu0 0.0
      %303 = vmatpush2.msra.mxu0 0.0
      %304 = vmatprep.subr.mxu0 0.0
      %305 = vmatpush2.msra.mxu0 0.0
      %306 = vmatprep.subr.mxu0 0.0
      %307 = vmatpush2.msra.mxu0 0.0
      %308 = vmatprep.subr.mxu0 0.0
      %309 = vmatpush2.msra.mxu0 0.0
      %310 = vmatprep.subr.mxu0 0.0
      %311 = vmatpush2.msra.mxu0 0.0
      %312 = vmatprep.subr.mxu0 0.0
      %313 = vmatpush2.msra.mxu0 0.0
      %314 = vmatprep.subr.mxu0 0.0
      %315 = vmatpush2.msra.mxu0 0.0
      %316 = vmatprep.mubr.f32.mxu0 0.0
      %317 = vmatmul.mubr.f32.gmra.mxu0 %v201
      %v318 = vpop.f32.mrf.mxu0
      %v319 = vadd.f32 %v197, %v318
      %v320 = vpop.f32.mrf.mxu0
      %321 = vmatprep.mubr.f32.mxu0 0.0
      %322 = vmatmul.mubr.f32.gmra.mxu0 %v204
      %v323 = vpop.f32.mrf.mxu0
      %v324 = vadd.f32 %v197, %v323
      %v325 = vpop.f32.mrf.mxu0
      %326 = vmatprep.mubr.f32.mxu0 0.0
      %327 = vmatmul.mubr.f32.gmra.mxu0 %v207
      %v328 = vpop.f32.mrf.mxu0
      %v329 = vadd.f32 %v197, %v328
      %v330 = vpop.f32.mrf.mxu0
      %331 = vmatprep.mubr.f32.mxu0 0.0
      %332 = vmatmul.mubr.f32.gmra.mxu0 %v210
      %v333 = vpop.f32.mrf.mxu0
      %v334 = vadd.f32 %v197, %v333
      %v335 = vpop.f32.mrf.mxu0
      %336 = vmatprep.mubr.f32.mxu0 0.0
      %337 = vmatmul.mubr.f32.gmra.mxu0 %v213
      %v338 = vpop.f32.mrf.mxu0
      %v339 = vadd.f32 %v197, %v338
      %v340 = vpop.f32.mrf.mxu0
      %341 = vmatprep.mubr.f32.mxu0 0.0
      %342 = vmatmul.mubr.f32.gmra.mxu0 %v216
      %v343 = vpop.f32.mrf.mxu0
      %v344 = vadd.f32 %v197, %v343
      %v345 = vpop.f32.mrf.mxu0
      %346 = vmatprep.mubr.f32.mxu0 0.0
      %347 = vmatmul.mubr.f32.gmra.mxu0 %v219
      %v348 = vpop.f32.mrf.mxu0
      %v349 = vadd.f32 %v197, %v348
      %v350 = vpop.f32.mrf.mxu0
      %351 = vmatprep.mubr.f32.mxu0 0.0
      %352 = vmatmul.mubr.f32.gmra.mxu0 %v222
      %v353 = vpop.f32.mrf.mxu0
      %v354 = vadd.f32 %v197, %v353
      %v355 = vpop.f32.mrf.mxu0
      %356 = vmatprep.mubr.f32.mxu0 0.0
      %357 = vmatmul.mubr.f32.gmra.mxu0 %v225
      %v358 = vpop.f32.mrf.mxu0
      %v359 = vadd.f32 %v197, %v358
      %v360 = vpop.f32.mrf.mxu0
      %361 = vmatprep.mubr.f32.mxu0 0.0
      %362 = vmatmul.mubr.f32.gmra.mxu0 %v228
      %v363 = vpop.f32.mrf.mxu0
      %v364 = vadd.f32 %v197, %v363
      %v365 = vpop.f32.mrf.mxu0
      %366 = vmatprep.mubr.f32.mxu0 0.0
      %367 = vmatmul.mubr.f32.gmra.mxu0 %v231
      %v368 = vpop.f32.mrf.mxu0
      %v369 = vadd.f32 %v197, %v368
      %v370 = vpop.f32.mrf.mxu0
      %371 = vmatprep.mubr.f32.mxu0 0.0
      %372 = vmatmul.mubr.f32.gmra.mxu0 %v234
      %v373 = vpop.f32.mrf.mxu0
      %v374 = vadd.f32 %v197, %v373
      %v375 = vpop.f32.mrf.mxu0
      %376 = vmatprep.mubr.f32.mxu0 0.0
      %377 = vmatmul.mubr.f32.gmra.mxu0 %v237
      %v378 = vpop.f32.mrf.mxu0
      %v379 = vadd.f32 %v197, %v378
      %v380 = vpop.f32.mrf.mxu0
      %381 = vmatprep.mubr.f32.mxu0 0.0
      %382 = vmatmul.mubr.f32.gmra.mxu0 %v240
      %v383 = vpop.f32.mrf.mxu0
      %v384 = vadd.f32 %v197, %v383
      %v385 = vpop.f32.mrf.mxu0
      %386 = vmatprep.mubr.f32.mxu0 0.0
      %387 = vmatmul.mubr.f32.gmra.mxu0 %v243
      %v388 = vpop.f32.mrf.mxu0
      %v389 = vadd.f32 %v197, %v388
      %v390 = vpop.f32.mrf.mxu0
      %391 = vmatprep.mubr.f32.mxu0 0.0
      %392 = vmatmul.mubr.f32.gmra.mxu0 %v246
      %v393 = vpop.f32.mrf.mxu0
      %v394 = vadd.f32 %v197, %v393
      %v395 = vpop.f32.mrf.mxu0
      %396 = vdwg.mxu0
      %v397 = vmax.f32 %v319, 0.0
      %v398 = vmax.f32 %v324, 0.0
      %v399 = vmax.f32 %v329, 0.0
      %v400 = vmax.f32 %v334, 0.0
      %v401 = vmax.f32 %v339, 0.0
      %v402 = vmax.f32 %v344, 0.0
      %v403 = vmax.f32 %v349, 0.0
      %v404 = vmax.f32 %v354, 0.0
      %v405 = vmax.f32 %v359, 0.0
      %v406 = vmax.f32 %v364, 0.0
      %v407 = vmax.f32 %v369, 0.0
      %v408 = vmax.f32 %v374, 0.0
      %v409 = vmax.f32 %v379, 0.0
      %v410 = vmax.f32 %v384, 0.0
      %v411 = vmax.f32 %v389, 0.0
      %v412 = vmax.f32 %v394, 0.0
      %vm413 = vcmask 261120
      %414 = vst.msk [vmem:[%s172] sm:$0xff] %vm413, %v397
      %415 = vst.msk [vmem:[%s172 + $0x8] sm:$0xff] %vm413, %v398
      %416 = vst.msk [vmem:[%s172 + $0x10] sm:$0xff] %vm413, %v399
      %417 = vst.msk [vmem:[%s172 + $0x18] sm:$0xff] %vm413, %v400
      %418 = vst.msk [vmem:[%s172 + $0x20] sm:$0xff] %vm413, %v401
      %419 = vst.msk [vmem:[%s172 + $0x28] sm:$0xff] %vm413, %v402
      %420 = vst.msk [vmem:[%s172 + $0x30] sm:$0xff] %vm413, %v403
      %421 = vst.msk [vmem:[%s172 + $0x38] sm:$0xff] %vm413, %v404
      %422 = vst.msk [vmem:[%s172 + $0x40] sm:$0xff] %vm413, %v405
      %423 = vst.msk [vmem:[%s172 + $0x48] sm:$0xff] %vm413, %v406
      %424 = vst.msk [vmem:[%s172 + $0x50] sm:$0xff] %vm413, %v407
      %425 = vst.msk [vmem:[%s172 + $0x58] sm:$0xff] %vm413, %v408
      %426 = vst.msk [vmem:[%s172 + $0x60] sm:$0xff] %vm413, %v409
      %427 = vst.msk [vmem:[%s172 + $0x68] sm:$0xff] %vm413, %v410
      %428 = vst.msk [vmem:[%s172 + $0x70] sm:$0xff] %vm413, %v411
      %429 = vst.msk [vmem:[%s172 + $0x78] sm:$0xff] %vm413, %v412
      %s430 = smul.u32 16, %s14
      %p431 = scmp.lt.s32.totalorder %s430, 31
      %s432 = scalar_select %p431, %s430, 31
      %s433 = smul.addr %s432, 8
      %s434 = scalar_lea.vmem %s3, %s433
      // Predicated region
      $region33: #{tpu_custom_call.1} parent=31 // pred_check
        %p435 = pneg %p100
      $region34: #{tpu_custom_call.1} parent=31 // pred_check_branch
        %437 = sbr.rel (%p435) target = $region36
      $region35: #{tpu_custom_call.1} parent=31 // pred_region
        %s438 = smul.u32 16, %s14
      $region36: #{tpu_custom_call.1} parent=31 // pred_fallthru
        _
    $region32: #{tpu_custom_call.1} parent=5 // pred_fallthru
      _
    %p439 = scmp.le.s32.totalorder 2, %s9
    // Predicated region
    $region37: #{tpu_custom_call.1} parent=5 // pred_check
      %p440 = pneg %p439
    $region38: #{tpu_custom_call.1} parent=5 // pred_check_branch
      %442 = sbr.rel (%p440) target = $region40
    $region39: #{tpu_custom_call.1} parent=5 // pred_region
      %s443 = ssub.s32 %s9, 2
      // Predicated region
      $region41: #{tpu_custom_call.1} parent=39 // pred_check
        %p444 = pneg %p106
      $region42: #{tpu_custom_call.1} parent=39 // pred_check_branch
        %446 = sbr.rel (%p444) target = $region44
      $region43: #{tpu_custom_call.1} parent=39 // pred_region
        %s447 = smul.u32 16, %s15
        %p448 = scmp.lt.s32.totalorder %s447, 31
        %s449 = scalar_select %p448, %s447, 31
        %s450 = smul.addr %s449, 8
        %s451 = scalar_lea.vmem %s3, %s450
      $region44: #{tpu_custom_call.1} parent=39 // pred_fallthru
        _
    $region40: #{tpu_custom_call.1} parent=5 // pred_fallthru
      _
  $region6: #{tpu_custom_call.1} parent=0 // loop_footer
    %s13 = sadd.s32 1, %s9
  $region7: #{tpu_custom_call.1} parent=0 // loop_footer_branch
    %8 = sbr.rel target = $region3
  $region8: #{tpu_custom_call.1} parent=0 // loop_exit
    _

</llo_original>
